<compile_context>
chip_gen: v6e
topology: v6e:2x2x1
jax: 0.10.0
libtpu: 0.0.40
codegen_flags: <defaults>
</compile_context>

<pallas_src>
import functools

import jax
import jax.numpy as jnp
from jax import lax
from jax.experimental import pallas as pl
from jax.experimental.pallas import tpu as pltpu


def _round_up(x, m):
    return (x + m - 1) // m * m


# out[m, n] = sum_k x[m, k] * w[n, k]  -- weight stays in PyTorch [udim, xdim]
# layout (contraction on the last dim of BOTH operands, same form as q @ k.T
# in flash attention), so no transpose is materialized anywhere.
_DOT_DIMS = (((1,), (1,)), ((), ()))


def _actor_single_block_kernel(x_ref, w_ref, o_ref):
    # Whole operands resident in VMEM; one MXU matmul with f32 accumulation.
    o_ref[...] = lax.dot_general(
        x_ref[...], w_ref[...], _DOT_DIMS,
        preferred_element_type=jnp.float32,
    ).astype(o_ref.dtype)


def _actor_tiled_kernel(x_ref, w_ref, o_ref):
    # Grid = (M-tiles, N-tiles, K-tiles); the output block's index map ignores
    # k, so o_ref stays resident in VMEM across the K reduction.  Output dtype
    # is f32 here, so we accumulate straight into it and skip a scratch buffer.
    partial = lax.dot_general(
        x_ref[...], w_ref[...], _DOT_DIMS,
        preferred_element_type=jnp.float32,
    )

    @pl.when(pl.program_id(2) == 0)
    def _():
        o_ref[...] = partial.astype(o_ref.dtype)

    @pl.when(pl.program_id(2) != 0)
    def _():
        o_ref[...] += partial.astype(o_ref.dtype)


@functools.cache
def _device_kind():
    try:
        return jax.devices()[0].device_kind.lower()
    except Exception:  # pragma: no cover - defensive
        return ""


def _is_v7x():
    return "v7" in _device_kind()


def _divisor_tile(dim, cap, align):
    """Largest multiple of `align` that divides `dim` and is <= cap."""
    cap = max(cap, align)
    best = align
    n = dim // align
    for d in range(1, n + 1):
        if n % d == 0 and d * align <= cap:
            best = d * align
    return best


def actor_forward(x, weight, *, force_tiled=False):
    """Pallas equivalent of Actor.forward: out = x @ weight.T (no bias).

    x:      [batch, xdim]  float32
    weight: [udim, xdim]   float32 (PyTorch nn.Linear layout, NOT transposed)
    returns [batch, udim]  float32
    """
    batch, xdim = x.shape
    udim, xdim_w = weight.shape
    assert xdim == xdim_w, "weight/input feature-dim mismatch"
    out_dtype = x.dtype
    itemsize = x.dtype.itemsize

    # Layout-rounded dims: this is the real VMEM footprint of the operands.
    M_pad = _round_up(batch, 8)
    K_pad = _round_up(xdim, 128)
    N_pad = _round_up(udim, 128)
    padded_bytes = (M_pad * K_pad + N_pad * K_pad + M_pad * N_pad) * itemsize
    w_bytes = N_pad * K_pad * itemsize

    # ------------------------------------------------------------------
    # Single-block (no-grid) path: one kernel invocation, no grid-step or
    # accumulator overhead.  Gate on the PADDED footprint.
    # ------------------------------------------------------------------
    if _is_v7x():
        # 32 MiB scoped of 64 MiB physical per TensorCore -> keep headroom,
        # and prefer >=2 parallel N tiles for big weights so both TCs work.
        single_block_budget = 16 * 2**20
        prefer_tiled = w_bytes > (1 << 20) and N_pad >= 256
    else:
        single_block_budget = 20 * 2**20
        prefer_tiled = False

    if (not force_tiled and not prefer_tiled
            and padded_bytes <= single_block_budget):
        vmem_limit = None
        if padded_bytes > 12 * 2**20:
            # Raise scoped VMEM explicitly when we exceed the smallest
            # generation default (v5e: 16 MiB), with headroom.
            vmem_limit = min(padded_bytes + (6 << 20), 30 * 2**20)
        return pl.pallas_call(
            _actor_single_block_kernel,
            out_shape=jax.ShapeDtypeStruct((batch, udim), out_dtype),
            in_specs=[
                pl.BlockSpec(memory_space=pltpu.MemorySpace.VMEM),
                pl.BlockSpec(memory_space=pltpu.MemorySpace.VMEM),
            ],
            out_specs=pl.BlockSpec(memory_space=pltpu.MemorySpace.VMEM),
            compiler_params=pltpu.CompilerParams(vmem_limit_bytes=vmem_limit),
        )(x, weight)

    # ------------------------------------------------------------------
    # Tiled (M, N, K) path.  Tiles divide the 8/128-rounded dims, so there is
    # no padding beyond layout rounding (none at all for aligned shapes).
    # ------------------------------------------------------------------
    tm_cap, tn_cap, tk_cap = 512, 256, 2048
    if _is_v7x() and w_bytes > (1 << 20) and N_pad >= 256:
        # Keep at least two parallel N tiles: each TensorCore streams half
        # of the (dominant) weight traffic.
        tn_cap = min(tn_cap, N_pad // 2)

    # Prefer a single M tile when batch is small: the weight is then DMA'd
    # from HBM exactly once (roofline floor for this layer).
    tm = _divisor_tile(M_pad, tm_cap, 8)
    tn = _divisor_tile(N_pad, tn_cap, 128)
    # Size tk from a VMEM budget: double-buffered x/w input tiles plus the
    # (double-buffered) resident output tile.  ~12 MiB stays inside the scoped
    # VMEM default on every generation (v5e 16 MiB, v6e/v7x 32 MiB).
    vmem_budget = 12 * 2**20
    k_bytes_per_step = 2 * (tm + tn) * itemsize
    k_room = max(128, (vmem_budget - 2 * tm * tn * itemsize) // k_bytes_per_step)
    tk = _divisor_tile(K_pad, min(tk_cap, k_room), 128)

    x_p = x if (M_pad, K_pad) == (batch, xdim) else jnp.pad(
        x, ((0, M_pad - batch), (0, K_pad - xdim)))
    w_p = weight if (N_pad, K_pad) == (udim, xdim) else jnp.pad(
        weight, ((0, N_pad - udim), (0, K_pad - xdim)))

    out_p = pl.pallas_call(
        _actor_tiled_kernel,
        out_shape=jax.ShapeDtypeStruct((M_pad, N_pad), out_dtype),
        grid=(M_pad // tm, N_pad // tn, K_pad // tk),
        in_specs=[
            pl.BlockSpec((tm, tk), lambda i, j, k: (i, k)),   # x tile
            pl.BlockSpec((tn, tk), lambda i, j, k: (j, k)),   # weight (native)
        ],
        out_specs=pl.BlockSpec((tm, tn), lambda i, j, k: (i, j)),
        compiler_params=pltpu.CompilerParams(
            dimension_semantics=("parallel", "parallel", "arbitrary"),
        ),
    )(x_p, w_p)

    if (M_pad, N_pad) == (batch, udim):
        return out_p
    return out_p[:batch, :udim]


def actor_forward_ref(x, weight):
    return x @ weight.T


if __name__ == "__main__":
    key = jax.random.PRNGKey(0)
    kx, kw, kx2, kw2 = jax.random.split(key, 4)

    # ---- small shapes implied by Actor(xdim, udim): batch=8, xdim=32, udim=16
    batch, xdim, udim = 8, 32, 16
    x = jax.random.normal(kx, (batch, xdim), dtype=jnp.float32)
    bound = 1.0 / (xdim ** 0.5)
    weight = jax.random.uniform(
        kw, (udim, xdim), dtype=jnp.float32, minval=-bound, maxval=bound)

    out = jax.block_until_ready(actor_forward(x, weight))
    ref = actor_forward_ref(x, weight)
    assert out.shape == (batch, udim)
    assert jnp.allclose(out, ref, atol=1e-5, rtol=1e-5), "small-shape mismatch"

    # ---- larger (aligned) shapes exercise the tiled (M, N, K) path:
    #      tm=384, tn=128, tk=640 -> grid (1, 3, 1), zero padding.
    b2, xd2, ud2 = 384, 640, 384
    x2 = jax.random.normal(kx2, (b2, xd2), dtype=jnp.float32)
    bound2 = 1.0 / (xd2 ** 0.5)
    w2 = jax.random.uniform(
        kw2, (ud2, xd2), dtype=jnp.float32, minval=-bound2, maxval=bound2)

    out2 = jax.block_until_ready(actor_forward(x2, w2, force_tiled=True))
    ref2 = actor_forward_ref(x2, w2)
    assert out2.shape == (b2, ud2)
    assert jnp.allclose(out2, ref2, atol=1e-4, rtol=1e-4), "tiled-path mismatch"

    # ---- unaligned shapes exercise the (minimal) layout-rounding pad path
    b3, xd3, ud3 = 200, 300, 130
    x3 = jax.random.normal(kx, (b3, xd3), dtype=jnp.float32)
    w3 = jax.random.uniform(kw, (ud3, xd3), dtype=jnp.float32,
                            minval=-0.05, maxval=0.05)
    out3 = jax.block_until_ready(actor_forward(x3, w3, force_tiled=True))
    assert jnp.allclose(out3, actor_forward_ref(x3, w3), atol=1e-4, rtol=1e-4)

    print("KERNEL_OK")
</pallas_src>

<mosaic_0001>
module attributes {stable_mosaic.version = 11 : i64} {
  func.func @_actor_single_block_kernel(%arg0: memref<8x32xf32, #tpu.memory_space<vmem>>, %arg1: memref<16x32xf32, #tpu.memory_space<vmem>>, %arg2: memref<8x16xf32, #tpu.memory_space<vmem>>) attributes {dimension_semantics = [], scalar_prefetch = 0 : i64, scratch_operands = 0 : i64, tpu.core_type = #tpu.core_type<tc>} {
    %c0 = arith.constant 0 : index
    %c0_0 = arith.constant 0 : index
    %0 = vector.load %arg0[%c0, %c0_0] : memref<8x32xf32, #tpu.memory_space<vmem>>, vector<8x32xf32>
    %c0_1 = arith.constant 0 : index
    %c0_2 = arith.constant 0 : index
    %1 = vector.load %arg1[%c0_1, %c0_2] : memref<16x32xf32, #tpu.memory_space<vmem>>, vector<16x32xf32>
    %cst = arith.constant dense<0.000000e+00> : vector<8x16xf32>
    %2 = tpu.matmul %0, %1, %cst {dimension_numbers = #tpu.dot_dimension_numbers<[1], [1], [0], [0], [0, 0, 1, 0], [], []>} : vector<8x32xf32>, vector<16x32xf32>, vector<8x16xf32> -> vector<8x16xf32>
    %c0_3 = arith.constant 0 : index
    %c0_4 = arith.constant 0 : index
    %3 = vector.load %arg2[%c0_3, %c0_4] : memref<8x16xf32, #tpu.memory_space<vmem>>, vector<8x16xf32>
    tpu.vector_store %arg2[%c0_3, %c0_4], %2 {strides = array<i32>} : memref<8x16xf32, #tpu.memory_space<vmem>>, vector<8x16xf32>,
    return
  }
}

</mosaic_0001>

<llo_original>
// kernel: tpu_custom_call.1
$region0: #{tpu_custom_call.1}
  #allocation0 [shape = 'u32[]', space=smem, size = 0x4, offset = 0x4, fixed_abs, tag = 'smem constant byte address 0x4 - core index']
  #allocation1 [shape = 'u32[144,128]{1,0:T(1,128)}', space=vmem, size = 0x12000, scoped, tag = 'internal scratch']
  %s0 = inlined_call_operand.hbm [shape: f32[8,32], index: 0, kind: input, shape index: {}]
  %s1 = inlined_call_operand.hbm [shape: f32[16,32], index: 1, kind: input, shape index: {}]
  %s2 = inlined_call_operand.hbm [shape: f32[8,16], index: 2, kind: output, shape index: {}]
  %s3 = sld [smem:[#allocation0]]
  $region26: #{tpu_custom_call.1} parent=0
    _
  %s5 = ssub.s32 1, %s3
  %s6 = scalar_select 0, %s5, %s3
  $region1: #{tpu_custom_call.1} parent=0
    #allocation2 [shape = 'u8[4096]{0}', space=vmem, size = 0x1000, scoped, tag = 'input window, operand 0, single buffered']
    #allocation3 [shape = 's32[1]{0}', space=sflag, size = 0x4, scoped, tag = 'scoped memory for tpu_custom_call.1']
    #allocation4 [shape = 's32[1]{0}', space=sflag, size = 0x4, scoped, tag = 'scoped memory for tpu_custom_call.1']
    #allocation5 [shape = 'u8[8192]{0}', space=vmem, size = 0x2000, scoped, tag = 'input window, operand 1, single buffered']
    #allocation6 [shape = 's32[1]{0}', space=sflag, size = 0x4, scoped, tag = 'scoped memory for tpu_custom_call.1']
    #allocation7 [shape = 'u8[4096]{0}', space=vmem, size = 0x1000, scoped, tag = 'output window, operand 0, single buffered']
    %7 = vsyncpa [#allocation3], 0
    %8 = vsyncpa [#allocation6], 0
    %9 = vsyncpa [#allocation4], 0
    // Predicated region
    $region2: #{tpu_custom_call.1} parent=1 // pred_check
      _
    $region3: #{tpu_custom_call.1} parent=1 // pred_check_branch
      %11 = sbr.rel (0) target = $region5
    $region4: #{tpu_custom_call.1} parent=1 // pred_region
      %s13 = ssub.s32 128, 128
      %14 = vsyncadd [#allocation3], %s13
      %s16 = sshll.u32 [#allocation2], 4
      %s17 = int_to_ptr.vmem [resolvable:$true] %s16
      %19 = dma.hbm_to_vmem [thread:$0]  %s0, 128, %s17, [#allocation3]
    $region5: #{tpu_custom_call.1} parent=1 // pred_fallthru
      _
    // Predicated region
    $region6: #{tpu_custom_call.1} parent=1 // pred_check
      _
    $region7: #{tpu_custom_call.1} parent=1 // pred_check_branch
      %21 = sbr.rel (0) target = $region9
    $region8: #{tpu_custom_call.1} parent=1 // pred_region
      %s23 = ssub.s32 256, 256
      %24 = vsyncadd [#allocation6], %s23
      %s25 = sshll.u32 [#allocation5], 4
      %s26 = int_to_ptr.vmem [resolvable:$true] %s25
      %31 = dma.hbm_to_vmem [thread:$0]  %s1, 256, %s26, [#allocation6], 128, 128, 8
    $region9: #{tpu_custom_call.1} parent=1 // pred_fallthru
      _
    // Predicated region
    $region10: #{tpu_custom_call.1} parent=1 // pred_check
      _
    $region11: #{tpu_custom_call.1} parent=1 // pred_check_branch
      %33 = sbr.rel (0) target = $region13
    $region12: #{tpu_custom_call.1} parent=1 // pred_region
      %34 = dma.done [#allocation3], 128
    $region13: #{tpu_custom_call.1} parent=1 // pred_fallthru
      _
    // Predicated region
    $region14: #{tpu_custom_call.1} parent=1 // pred_check
      _
    $region15: #{tpu_custom_call.1} parent=1 // pred_check_branch
      %36 = sbr.rel (0) target = $region17
    $region16: #{tpu_custom_call.1} parent=1 // pred_region
      %37 = dma.done [#allocation6], 256
    $region17: #{tpu_custom_call.1} parent=1 // pred_fallthru
      _
    %v38 = vld [vmem:[#allocation2] sm:$0xff]
    %v39 = vld [vmem:[#allocation5] sm:$0xff]
    %v40 = vld [vmem:[#allocation5 + $0x8] sm:$0xff]
    %vm41 = vcmask 261120
    %v43 = vsel %vm41, %v38, 0
    %v46 = vsel %vm41, %v39, 0
    %v49 = vsel %vm41, %v40, 0
    %51 = vmatprep.subr.mxu0 0.0
    %52 = vmatpush1.xpose.msra.mxu0 0.0
    %53 = vmatprep.subr.mxu0 0.0
    %54 = vmatpush1.xpose.msra.mxu0 0.0
    %55 = vmatprep.subr.mxu0 0.0
    %56 = vmatpush1.xpose.msra.mxu0 0.0
    %57 = vmatprep.subr.mxu0 0.0
    %58 = vmatpush1.xpose.msra.mxu0 0.0
    %59 = vmatprep.subr.mxu0 0.0
    %60 = vmatpush1.xpose.msra.mxu0 0.0
    %61 = vmatprep.subr.mxu0 0.0
    %62 = vmatpush1.xpose.msra.mxu0 0.0
    %63 = vmatprep.subr.mxu0 0.0
    %64 = vmatpush1.xpose.msra.mxu0 0.0
    %65 = vmatprep.subr.mxu0 0.0
    %66 = vmatpush1.xpose.msra.mxu0 0.0
    %67 = vmatprep.subr.mxu0 0.0
    %68 = vmatpush1.xpose.msra.mxu0 0.0
    %69 = vmatprep.subr.mxu0 0.0
    %70 = vmatpush1.xpose.msra.mxu0 0.0
    %71 = vmatprep.subr.mxu0 0.0
    %72 = vmatpush1.xpose.msra.mxu0 0.0
    %73 = vmatprep.subr.mxu0 0.0
    %74 = vmatpush1.xpose.msra.mxu0 0.0
    %75 = vmatprep.subr.mxu0 0.0
    %76 = vmatpush1.xpose.msra.mxu0 0.0
    %77 = vmatprep.subr.mxu0 0.0
    %78 = vmatpush1.xpose.msra.mxu0 0.0
    %79 = vmatprep.subr.mxu0 0.0
    %80 = vmatpush1.xpose.msra.mxu0 %v49
    %81 = vmatprep.subr.mxu0 0.0
    %82 = vmatpush1.xpose.msra.mxu0 %v46
    %83 = vmatprep.subr.mxu0 0.0
    %84 = vmatpush2.xpose.msra.mxu0 0.0
    %85 = vmatprep.subr.mxu0 0.0
    %86 = vmatpush2.xpose.msra.mxu0 0.0
    %87 = vmatprep.subr.mxu0 0.0
    %88 = vmatpush2.xpose.msra.mxu0 0.0
    %89 = vmatprep.subr.mxu0 0.0
    %90 = vmatpush2.xpose.msra.mxu0 0.0
    %91 = vmatprep.subr.mxu0 0.0
    %92 = vmatpush2.xpose.msra.mxu0 0.0
    %93 = vmatprep.subr.mxu0 0.0
    %94 = vmatpush2.xpose.msra.mxu0 0.0
    %95 = vmatprep.subr.mxu0 0.0
    %96 = vmatpush2.xpose.msra.mxu0 0.0
    %97 = vmatprep.subr.mxu0 0.0
    %98 = vmatpush2.xpose.msra.mxu0 0.0
    %99 = vmatprep.subr.mxu0 0.0
    %100 = vmatpush2.xpose.msra.mxu0 0.0
    %101 = vmatprep.subr.mxu0 0.0
    %102 = vmatpush2.xpose.msra.mxu0 0.0
    %103 = vmatprep.subr.mxu0 0.0
    %104 = vmatpush2.xpose.msra.mxu0 0.0
    %105 = vmatprep.subr.mxu0 0.0
    %106 = vmatpush2.xpose.msra.mxu0 0.0
    %107 = vmatprep.subr.mxu0 0.0
    %108 = vmatpush2.xpose.msra.mxu0 0.0
    %109 = vmatprep.subr.mxu0 0.0
    %110 = vmatpush2.xpose.msra.mxu0 0.0
    %111 = vmatprep.subr.mxu0 0.0
    %112 = vmatpush2.xpose.msra.mxu0 0.0
    %113 = vmatprep.subr.mxu0 0.0
    %114 = vmatpush2.xpose.msra.mxu0 0.0
    %115 = vmatprep.mubr.f32.mxu0 0.0
    %116 = vmatmul.mubr.f32.gmra.mxu0 %v43
    %v117 = vpop.f32.mrf.mxu0
    %v118 = vadd.f32 0.0, %v117
    %v119 = vpop.f32.mrf.mxu0
    %120 = vdwg.mxu0
    %vm121 = vcmask 130048
    %122 = vst.msk [vmem:[#allocation7] sm:$0xff] %vm121, %v118
    // Predicated region
    $region18: #{tpu_custom_call.1} parent=1 // pred_check
      _
    $region19: #{tpu_custom_call.1} parent=1 // pred_check_branch
      %124 = sbr.rel (0) target = $region21
    $region20: #{tpu_custom_call.1} parent=1 // pred_region
      %s126 = ssub.s32 128, 128
      %127 = vsyncadd [#allocation4], %s126
      %s129 = sshll.u32 [#allocation7], 4
      %s130 = int_to_ptr.vmem [resolvable:$true] %s129
      %132 = dma.vmem_to_hbm [thread:$0]  %s130, 128, %s2, [#allocation4]
    $region21: #{tpu_custom_call.1} parent=1 // pred_fallthru
      _
    // Predicated region
    $region22: #{tpu_custom_call.1} parent=1 // pred_check
      _
    $region23: #{tpu_custom_call.1} parent=1 // pred_check_branch
      %134 = sbr.rel (0) target = $region25
    $region24: #{tpu_custom_call.1} parent=1 // pred_region
      %135 = dma.done [#allocation4], 128
    $region25: #{tpu_custom_call.1} parent=1 // pred_fallthru
      _
    %136 = vsyncpa [#allocation3], 1
    %137 = vsyncpa [#allocation6], 1
    %138 = vsyncpa [#allocation4], 1

</llo_original>
